<compile_context>
chip_gen: v5e
topology: v5e:2x2
jax: 0.10.0
libtpu: 0.0.40
codegen_flags: <defaults>
</compile_context>

<pallas_src>
import jax
import jax.numpy as jnp
from jax.experimental import pallas as pl
from jax.experimental.pallas import tpu as pltpu


_NEG_BIG = -1e30  # finite "-inf" for padded label columns (avoids NaN corner cases)


def _round_up(x, m):
    return (x + m - 1) // m * m


def _logits_kernel(x_ref, w_ref, b_ref, o_ref):
    acc = (
        jnp.dot(x_ref[...], w_ref[...], preferred_element_type=jnp.float32)
        + b_ref[...]
    )
    o_ref[...] = acc.astype(o_ref.dtype)


def _loss_kernel(x_ref, w_ref, b_ref, lab_ref, msk_ref,
                 logits_ref, loss_ref, num_ref, den_ref):
    i = pl.program_id(0)

    @pl.when(i == 0)
    def _():
        num_ref[...] = jnp.zeros_like(num_ref)
        den_ref[...] = jnp.zeros_like(den_ref)

    logits = (
        jnp.dot(x_ref[...], w_ref[...], preferred_element_type=jnp.float32)
        + b_ref[...]
    )                                                       # (tN, Lp) f32
    logits_ref[...] = logits.astype(logits_ref.dtype)

    # Per-token cross entropy (nn.CrossEntropyLoss(reduction='none')).
    # Padded label columns carry -1e30 bias -> never the max, exp underflows to 0.
    m = jnp.max(logits, axis=-1, keepdims=True)             # (tN, 1)
    lse = m + jnp.log(jnp.sum(jnp.exp(logits - m), axis=-1, keepdims=True))
    col = jax.lax.broadcasted_iota(jnp.int32, logits.shape, 1)
    onehot = (col == lab_ref[...]).astype(jnp.float32)      # labels: (tN, 1)
    picked = jnp.sum(onehot * logits, axis=-1, keepdims=True)
    per_tok = lse - picked                                  # (tN, 1)

    msk = msk_ref[...]                                      # (tN, 1) f32; 0 on pad / pos-0 rows
    num_ref[...] += jnp.sum(per_tok * msk).reshape(1, 1)
    den_ref[...] += jnp.sum(msk).reshape(1, 1)

    @pl.when(i == pl.num_programs(0) - 1)
    def _():
        loss_ref[...] = num_ref[...] / den_ref[...]


class SequenceLabelingBasePallas:
    """Pallas port of SequenceLabelingBase (eval-mode dropout)."""

    def __init__(self, drop_prob, hidden_size, num_labels, key):
        self.drop_prob = drop_prob            # eval-mode: dropout is identity
        self.hidden_size = hidden_size
        self.num_labels = num_labels
        kw, kb = jax.random.split(key)
        # Mimic torch.nn.Linear init: uniform(-1/sqrt(H), 1/sqrt(H)).
        bound = 1.0 / jnp.sqrt(jnp.float32(hidden_size))
        self.weight = jax.random.uniform(
            kw, (num_labels, hidden_size), jnp.float32, -bound, bound)
        self.bias = jax.random.uniform(
            kb, (num_labels,), jnp.float32, -bound, bound)
        # Lane-dense padded classifier: (H, Lp) weight / (1, Lp) bias.
        L, H = num_labels, hidden_size
        self._Lp = _round_up(max(L, 1), 128)
        self._w_pad = jnp.zeros((H, self._Lp), jnp.float32).at[:, :L].set(self.weight.T)
        self._b_pad = jnp.full((1, self._Lp), _NEG_BIG, jnp.float32).at[0, :L].set(self.bias)

    def _tile_n(self, n, h, itemsize):
        # Keep double-buffered activation tiles around/below ~8 MiB (safe on
        # v7x's 32 MiB scoped VMEM as well as v5e/v6e).
        t = min(512, max(8, (8 * 1024 * 1024) // (2 * h * itemsize)))
        t = max(8, (t // 8) * 8)
        return min(t, _round_up(max(n, 1), 8))

    def __call__(self, last_encoder_layer, attention_mask=None, labels=None):
        B, S, H = last_encoder_layer.shape
        L, Lp = self.num_labels, self._Lp
        dtype = last_encoder_layer.dtype

        # Contiguous flatten (no copy); position-0 rows are masked/sliced away.
        x_flat = last_encoder_layer.reshape(B * S, H)
        N = B * S
        itemsize = x_flat.dtype.itemsize

        tN = self._tile_n(N, H, itemsize)
        Np = _round_up(N, tN)
        if Np != N:
            x_flat = jnp.pad(x_flat, ((0, Np - N), (0, 0)))
        grid = (Np // tN,)

        w = self._w_pad.astype(dtype)   # MXU runs in the activation dtype
        b = self._b_pad                 # bias added in f32 post-matmul

        x_spec = pl.BlockSpec((tN, H), lambda i: (i, 0))
        w_spec = pl.BlockSpec((H, Lp), lambda i: (0, 0))
        b_spec = pl.BlockSpec((1, Lp), lambda i: (0, 0))
        logits_spec = pl.BlockSpec((tN, Lp), lambda i: (i, 0))
        vec_spec = pl.BlockSpec((tN, 1), lambda i: (i, 0))

        if labels is None:
            logits_pad = pl.pallas_call(
                _logits_kernel,
                out_shape=jax.ShapeDtypeStruct((Np, Lp), dtype),
                grid_spec=pltpu.PrefetchScalarGridSpec(
                    num_scalar_prefetch=0,
                    grid=grid,
                    in_specs=[x_spec, w_spec, b_spec],
                    out_specs=logits_spec,
                ),
                compiler_params=pltpu.CompilerParams(
                    dimension_semantics=("parallel",),
                    vmem_limit_bytes=32 * 1024 * 1024,
                ),
                cost_estimate=pl.CostEstimate(
                    flops=2 * Np * H * Lp,
                    transcendentals=0,
                    bytes_accessed=(Np * H * itemsize + Np * Lp * itemsize
                                    + H * Lp * itemsize),
                ),
            )(x_flat, w, b)
            return logits_pad[:N].reshape(B, S, Lp)[:, 1:, :L]

        # Labels/mask are laid out over all S positions; position 0 gets a
        # dummy label (0) and a zero mask weight, so it never contributes.
        labels_i32 = labels.astype(jnp.int32)
        lab_full = jnp.zeros((B, S), jnp.int32).at[:, 1:].set(labels_i32)
        msk_full = jnp.zeros((B, S), jnp.float32).at[:, 1:].set(
            attention_mask[:, 1:].astype(jnp.float32))
        lab_flat = lab_full.reshape(N, 1)
        msk_flat = msk_full.reshape(N, 1)
        if Np != N:
            lab_flat = jnp.pad(lab_flat, ((0, Np - N), (0, 0)))
            msk_flat = jnp.pad(msk_flat, ((0, Np - N), (0, 0)))  # pad rows masked out

        logits_pad, loss = pl.pallas_call(
            _loss_kernel,
            out_shape=(
                jax.ShapeDtypeStruct((Np, Lp), dtype),
                jax.ShapeDtypeStruct((1, 1), jnp.float32),
            ),
            grid_spec=pltpu.PrefetchScalarGridSpec(
                num_scalar_prefetch=0,
                grid=grid,
                in_specs=[x_spec, w_spec, b_spec, vec_spec, vec_spec],
                out_specs=(logits_spec, pl.BlockSpec((1, 1), lambda i: (0, 0))),
                scratch_shapes=[pltpu.VMEM((1, 1), jnp.float32),   # numerator
                                pltpu.VMEM((1, 1), jnp.float32)],  # denominator
            ),
            compiler_params=pltpu.CompilerParams(
                dimension_semantics=("arbitrary",),  # on-chip loss accumulation
                vmem_limit_bytes=32 * 1024 * 1024,
            ),
            cost_estimate=pl.CostEstimate(
                flops=2 * Np * H * Lp,
                transcendentals=Np * Lp,
                bytes_accessed=(Np * H * itemsize + Np * Lp * itemsize
                                + Np * 2 * 4 + H * Lp * itemsize),
            ),
        )(x_flat, w, b, lab_flat, msk_flat)

        logits = logits_pad[:N].reshape(B, S, Lp)[:, 1:, :L]
        return loss[0, 0], logits


def _reference(model, x, attention_mask, labels):
    # Pure-JAX reference for sanity checking.
    seq = x[:, 1:]
    logits = jnp.einsum("bsh,lh->bsl", seq, model.weight) + model.bias
    logp = jax.nn.log_softmax(logits, axis=-1)
    per = -jnp.take_along_axis(logp, labels[..., None], axis=-1)[..., 0]
    m = attention_mask[:, 1:].astype(jnp.float32)
    loss = jnp.sum(per * m) / jnp.sum(m)
    return loss, logits


if __name__ == "__main__":
    B, S, H, L = 2, 8, 32, 5
    key = jax.random.PRNGKey(0)
    k_param, k_x, k_lab = jax.random.split(key, 3)

    model = SequenceLabelingBasePallas(drop_prob=0.1, hidden_size=H,
                                       num_labels=L, key=k_param)

    last_encoder_layer = jax.random.normal(k_x, (B, S, H), jnp.float32)
    attention_mask = jnp.ones((B, S), jnp.int32).at[1, -3:].set(0)
    labels = jax.random.randint(k_lab, (B, S - 1), 0, L, jnp.int32)

    # Path without labels -> logits only.
    logits_only = model(last_encoder_layer)
    jax.block_until_ready(logits_only)

    # Path with labels -> (loss, logits).
    loss, logits = model(last_encoder_layer, attention_mask, labels)
    jax.block_until_ready((loss, logits))

    ref_loss, ref_logits = _reference(model, last_encoder_layer,
                                      attention_mask, labels)
    assert logits_only.shape == (B, S - 1, L)
    assert logits.shape == (B, S - 1, L)
    assert jnp.allclose(logits_only, ref_logits, atol=1e-5, rtol=1e-5)
    assert jnp.allclose(logits, ref_logits, atol=1e-5, rtol=1e-5)
    assert jnp.allclose(loss, ref_loss, atol=1e-5, rtol=1e-5)

    print("KERNEL_OK")
</pallas_src>

<mosaic_0001>
module attributes {stable_mosaic.version = 11 : i64} {
  func.func @_logits_kernel(%arg0: i32, %arg1: memref<16x32xf32, #tpu.memory_space<vmem>>, %arg2: memref<32x128xf32, #tpu.memory_space<vmem>>, %arg3: memref<1x128xf32, #tpu.memory_space<vmem>>, %arg4: memref<16x128xf32, #tpu.memory_space<vmem>>) attributes {dimension_semantics = [#tpu.dimension_semantics<parallel>], iteration_bounds = array<i64: 1>, scalar_prefetch = 0 : i64, scratch_operands = 0 : i64, tpu.core_type = #tpu.core_type<tc>, window_params = [{transform_indices = @transform_0, window_bounds = array<i64: 16, 32>}, {pipeline_mode = #tpu.pipeline_mode<synchronous>, transform_indices = @transform_1, window_bounds = array<i64: 32, 128>}, {pipeline_mode = #tpu.pipeline_mode<synchronous>, transform_indices = @transform_2, window_bounds = array<i64: 1, 128>}, {transform_indices = @transform_3, window_bounds = array<i64: 16, 128>}]} {
    %c0 = arith.constant 0 : index
    %c0_0 = arith.constant 0 : index
    %0 = vector.load %arg1[%c0, %c0_0] : memref<16x32xf32, #tpu.memory_space<vmem>>, vector<16x32xf32>
    %c0_1 = arith.constant 0 : index
    %c0_2 = arith.constant 0 : index
    %1 = vector.load %arg2[%c0_1, %c0_2] : memref<32x128xf32, #tpu.memory_space<vmem>>, vector<32x128xf32>
    %cst = arith.constant dense<0.000000e+00> : vector<16x128xf32>
    %2 = tpu.matmul %0, %1, %cst {dimension_numbers = #tpu.dot_dimension_numbers<[1], [0], [0], [1], [0, 0, 1, 1], [], []>} : vector<16x32xf32>, vector<32x128xf32>, vector<16x128xf32> -> vector<16x128xf32>
    %c0_3 = arith.constant 0 : index
    %c0_4 = arith.constant 0 : index
    %3 = vector.load %arg3[%c0_3, %c0_4] : memref<1x128xf32, #tpu.memory_space<vmem>>, vector<1x128xf32>
    %4 = vector.broadcast %3 : vector<1x128xf32> to vector<16x128xf32>
    %5 = arith.addf %2, %4 : vector<16x128xf32>
    %c0_5 = arith.constant 0 : index
    %c0_6 = arith.constant 0 : index
    %6 = vector.load %arg4[%c0_5, %c0_6] : memref<16x128xf32, #tpu.memory_space<vmem>>, vector<16x128xf32>
    tpu.vector_store %arg4[%c0_5, %c0_6], %5 {strides = array<i32>} : memref<16x128xf32, #tpu.memory_space<vmem>>, vector<16x128xf32>,
    return
  }
  func.func @transform_0(%arg0: i32) -> (i32, i32) {
    %c0_i32 = arith.constant 0 : i32
    %c0_i32_0 = arith.constant 0 : i32
    return %arg0, %c0_i32 : i32, i32
  }
  func.func @transform_1(%arg0: i32) -> (i32, i32) {
    %c0_i32 = arith.constant 0 : i32
    %c0_i32_0 = arith.constant 0 : i32
    %c0_i32_1 = arith.constant 0 : i32
    return %c0_i32, %c0_i32_0 : i32, i32
  }
  func.func @transform_2(%arg0: i32) -> (i32, i32) {
    %c0_i32 = arith.constant 0 : i32
    %c0_i32_0 = arith.constant 0 : i32
    %c0_i32_1 = arith.constant 0 : i32
    return %c0_i32, %c0_i32_0 : i32, i32
  }
  func.func @transform_3(%arg0: i32) -> (i32, i32) {
    %c0_i32 = arith.constant 0 : i32
    %c0_i32_0 = arith.constant 0 : i32
    return %arg0, %c0_i32 : i32, i32
  }
}

</mosaic_0001>

<llo_original>
// kernel: tpu_custom_call.1
$region0: #{tpu_custom_call.1}
  #allocation0 [shape = 'u32[]', space=smem, size = 0x4, offset = 0x4, fixed_abs, tag = 'smem constant byte address 0x4 - core index']
  #allocation1 [shape = 'u32[72,128]{1,0:T(1,128)}', space=vmem, size = 0x9000, scoped, tag = 'internal scratch']
  %s0 = inlined_call_operand.hbm [shape: f32[16,32], index: 0, kind: input, shape index: {}]
  %s1 = inlined_call_operand.hbm [shape: f32[32,128], index: 1, kind: input, shape index: {}]
  %s2 = inlined_call_operand.vmem [shape: f32[1,128], index: 2, kind: input, shape index: {}]
  %s3 = inlined_call_operand.hbm [shape: f32[16,128], index: 3, kind: output, shape index: {}]
  %s4 = sld [smem:[#allocation0]]
  $region30: #{tpu_custom_call.1} parent=0
    _
  %s6 = ssub.s32 1, %s4
  %s7 = scalar_select 0, %s6, %s4
  $region1: #{tpu_custom_call.1} parent=0
    #allocation2 [shape = 'u8[8192]{0}', space=vmem, size = 0x2000, scoped, tag = 'input window, operand 0, single buffered']
    #allocation3 [shape = 's32[1]{0}', space=sflag, size = 0x4, scoped, tag = 'scoped memory for tpu_custom_call.1']
    #allocation4 [shape = 's32[1]{0}', space=sflag, size = 0x4, scoped, tag = 'scoped memory for tpu_custom_call.1']
    #allocation5 [shape = 'u8[16384]{0}', space=vmem, size = 0x4000, scoped, tag = 'input window, operand 1, single buffered']
    #allocation6 [shape = 's32[1]{0}', space=sflag, size = 0x4, scoped, tag = 'scoped memory for tpu_custom_call.1']
    #allocation7 [shape = 'u8[8192]{0}', space=vmem, size = 0x2000, scoped, tag = 'output window, operand 0, single buffered']
    %8 = vsyncpa [#allocation3], 0
    %9 = vsyncpa [#allocation6], 0
    %10 = vsyncpa [#allocation4], 0
    // Predicated region
    $region2: #{tpu_custom_call.1} parent=1 // pred_check
      _
    $region3: #{tpu_custom_call.1} parent=1 // pred_check_branch
      %12 = sbr.rel (0) target = $region5
    $region4: #{tpu_custom_call.1} parent=1 // pred_region
      %14 = vsyncadd [#allocation3], 0
      %s15 = sshll.u32 %s0, 4
      %s16 = int_to_ptr.hbm [resolvable:$true] %s15
      %s17 = sshll.u32 [#allocation2], 4
      %s18 = int_to_ptr.vmem [resolvable:$true] %s17
      %23 = dma.hbm_to_vmem [thread:$0]  %s16, 256, %s18, [#allocation3], 128, 128, 8
    $region5: #{tpu_custom_call.1} parent=1 // pred_fallthru
      _
    // Predicated region
    $region6: #{tpu_custom_call.1} parent=1 // pred_check
      _
    $region7: #{tpu_custom_call.1} parent=1 // pred_check_branch
      %25 = sbr.rel (0) target = $region9
    $region8: #{tpu_custom_call.1} parent=1 // pred_region
      %27 = vsyncadd [#allocation6], 0
      %s28 = sshll.u32 %s1, 4
      %s29 = int_to_ptr.hbm [resolvable:$true] %s28
      %s30 = sshll.u32 [#allocation5], 4
      %s31 = int_to_ptr.vmem [resolvable:$true] %s30
      %36 = dma.hbm_to_vmem [thread:$0]  %s29, 512, %s31, [#allocation6], 128, 128, 8
    $region9: #{tpu_custom_call.1} parent=1 // pred_fallthru
      _
    // Predicated region
    $region10: #{tpu_custom_call.1} parent=1 // pred_check
      _
    $region11: #{tpu_custom_call.1} parent=1 // pred_check_branch
      %38 = sbr.rel (0) target = $region13
    $region12: #{tpu_custom_call.1} parent=1 // pred_region
      _
    $region13: #{tpu_custom_call.1} parent=1 // pred_fallthru
      _
    // Predicated region
    $region14: #{tpu_custom_call.1} parent=1 // pred_check
      _
    $region15: #{tpu_custom_call.1} parent=1 // pred_check_branch
      %40 = sbr.rel (0) target = $region17
    $region16: #{tpu_custom_call.1} parent=1 // pred_region
      %42 = dma.done [#allocation3], 256
    $region17: #{tpu_custom_call.1} parent=1 // pred_fallthru
      _
    // Predicated region
    $region18: #{tpu_custom_call.1} parent=1 // pred_check
      _
    $region19: #{tpu_custom_call.1} parent=1 // pred_check_branch
      %44 = sbr.rel (0) target = $region21
    $region20: #{tpu_custom_call.1} parent=1 // pred_region
      %46 = dma.done [#allocation6], 512
    $region21: #{tpu_custom_call.1} parent=1 // pred_fallthru
      _
    %v47 = vld [vmem:[#allocation2] sm:$0xff]
    %v48 = vld [vmem:[#allocation2 + $0x8] sm:$0xff]
    %v49 = vld [vmem:[#allocation5] sm:$0xff]
    %v50 = vld [vmem:[#allocation5 + $0x8] sm:$0xff]
    %v51 = vld [vmem:[#allocation5 + $0x10] sm:$0xff]
    %v52 = vld [vmem:[#allocation5 + $0x18] sm:$0xff]
    %v53 = vld [vmem:[%s2] sm:$0x1]
    %v55 = vperm.slane %v53, 0
    %vm57 = vcmask 261120
    %v59 = vsel %vm57, %v47, 0
    %v62 = vsel %vm57, %v48, 0
    %64 = vmatpush.msra.mxu0 0.0
    %65 = vmatpush.msra.mxu0 0.0
    %66 = vmatpush.msra.mxu0 0.0
    %67 = vmatpush.msra.mxu0 0.0
    %68 = vmatpush.msra.mxu0 0.0
    %69 = vmatpush.msra.mxu0 0.0
    %70 = vmatpush.msra.mxu0 0.0
    %71 = vmatpush.msra.mxu0 0.0
    %72 = vmatpush.msra.mxu0 0.0
    %73 = vmatpush.msra.mxu0 0.0
    %74 = vmatpush.msra.mxu0 0.0
    %75 = vmatpush.msra.mxu0 0.0
    %76 = vmatpush.msra.mxu0 %v52
    %77 = vmatpush.msra.mxu0 %v51
    %78 = vmatpush.msra.mxu0 %v50
    %79 = vmatpush.msra.mxu0 %v49
    %80 = vmatmul.f32.gmra.mxu0 %v59
    %v81 = vpop.f32.mrf.mxu0
    %v82 = vadd.f32 %v55, %v81
    %83 = vmatmul.f32.gmra.mxu0 %v62
    %v84 = vpop.f32.mrf.mxu0
    %v85 = vadd.f32 %v55, %v84
    %86 = vdwg.mxu0
    %87 = vst [vmem:[#allocation7] sm:$0xff] %v82
    %88 = vst [vmem:[#allocation7 + $0x8] sm:$0xff] %v85
    // Predicated region
    $region22: #{tpu_custom_call.1} parent=1 // pred_check
      _
    $region23: #{tpu_custom_call.1} parent=1 // pred_check_branch
      %90 = sbr.rel (0) target = $region25
    $region24: #{tpu_custom_call.1} parent=1 // pred_region
      %92 = vsyncadd [#allocation4], 0
      %s93 = sshll.u32 [#allocation7], 4
      %s94 = int_to_ptr.vmem [resolvable:$true] %s93
      %s95 = sshll.u32 %s3, 4
      %s96 = int_to_ptr.hbm [resolvable:$true] %s95
      %101 = dma.vmem_to_hbm [thread:$0]  %s94, 256, %s96, [#allocation4], 128, 128, 8
    $region25: #{tpu_custom_call.1} parent=1 // pred_fallthru
      _
    // Predicated region
    $region26: #{tpu_custom_call.1} parent=1 // pred_check
      _
    $region27: #{tpu_custom_call.1} parent=1 // pred_check_branch
      %103 = sbr.rel (0) target = $region29
    $region28: #{tpu_custom_call.1} parent=1 // pred_region
      %105 = dma.done [#allocation4], 256
    $region29: #{tpu_custom_call.1} parent=1 // pred_fallthru
      _
    %106 = vsyncpa [#allocation3], 1
    %107 = vsyncpa [#allocation6], 1
    %108 = vsyncpa [#allocation4], 1

</llo_original>
